<compile_context>
chip_gen: v7x
topology: tpu7x:2x2x1
jax: 0.10.0
libtpu: 0.0.40
codegen_flags: <defaults>
</compile_context>

<pallas_src>
import functools

import jax
import jax.numpy as jnp
from jax import lax
from jax.experimental import pallas as pl
from jax.experimental.pallas import tpu as pltpu


NEG_SLOPE = 0.4  # nn.LeakyReLU(0.4)


# ---------------------------------------------------------------------------
# Generic tiled matmul kernel:  out = [leaky_relu]( A @ B [+ bias] )
# A, B arrive already in bf16 (cast once in the wrapper); accumulate in f32.
# ---------------------------------------------------------------------------
def _make_matmul_kernel(has_bias, leaky_relu):
    def _finalize(acc_ref, bias_ref, o_ref):
        r = acc_ref[...]                       # f32
        if has_bias:
            r = r + bias_ref[...]              # f32 epilogue
        if leaky_relu:
            r = jnp.where(r >= 0, r, NEG_SLOPE * r)
        o_ref[...] = r.astype(o_ref.dtype)

    if has_bias:
        def kernel(a_ref, b_ref, bias_ref, o_ref, acc_ref):
            k = pl.program_id(2)

            @pl.when(k == 0)
            def _():
                acc_ref[...] = jnp.zeros_like(acc_ref)

            acc_ref[...] += jnp.dot(a_ref[...], b_ref[...],
                                    preferred_element_type=jnp.float32)

            @pl.when(k == pl.num_programs(2) - 1)
            def _():
                _finalize(acc_ref, bias_ref, o_ref)
    else:
        def kernel(a_ref, b_ref, o_ref, acc_ref):
            k = pl.program_id(2)

            @pl.when(k == 0)
            def _():
                acc_ref[...] = jnp.zeros_like(acc_ref)

            acc_ref[...] += jnp.dot(a_ref[...], b_ref[...],
                                    preferred_element_type=jnp.float32)

            @pl.when(k == pl.num_programs(2) - 1)
            def _():
                _finalize(acc_ref, None, o_ref)

    return kernel


def tiled_matmul(a, b, bias, *, tm, tk, tn, leaky_relu=False,
                 out_dtype=jnp.bfloat16, buffer_count=None):
    """a: [M, K] bf16, b: [K, N] bf16, bias: None or [1, N] f32. Tile-aligned."""
    M, K = a.shape
    K2, N = b.shape
    assert K == K2 and M % tm == 0 and K % tk == 0 and N % tn == 0
    has_bias = bias is not None
    if has_bias:
        assert bias.shape == (1, N)

    gi, gj, gk = M // tm, N // tn, K // tk

    # Optional deeper pipelining (v7x sweep knob); default depth-2.
    extra = {}
    if buffer_count is not None and buffer_count != 2:
        extra = dict(pipeline_mode=pl.Buffered(buffer_count))

    in_specs = [
        pl.BlockSpec((tm, tk), lambda i, j, k: (i, k), **extra),
        pl.BlockSpec((tk, tn), lambda i, j, k: (k, j), **extra),
    ]
    operands = [a, b]
    if has_bias:
        in_specs.append(pl.BlockSpec((1, tn), lambda i, j, k: (0, j)))
        operands.append(bias)

    out_itemsize = jnp.dtype(out_dtype).itemsize
    # Account for tiling reuse: A is streamed once per j tile, B once per i tile.
    flops = 2 * M * K * N
    bytes_accessed = (gj * M * K * a.dtype.itemsize
                      + gi * K * N * b.dtype.itemsize
                      + M * N * out_itemsize
                      + (gi * gk * N * bias.dtype.itemsize if has_bias else 0))

    # Explicit VMEM budget: double-buffered bf16 inputs + double-buffered output
    # + f32 accumulator scratch.  Keep well under v7x's 64 MiB physical VMEM.
    nbuf = buffer_count or 2
    vmem_bytes = (nbuf * (tm * tk * a.dtype.itemsize + tk * tn * b.dtype.itemsize)
                  + 2 * tm * tn * out_itemsize
                  + tm * tn * 4
                  + (2 * tn * bias.dtype.itemsize if has_bias else 0))
    assert vmem_bytes < 56 * 1024 * 1024, (
        f"tile config ({tm},{tk},{tn}) needs ~{vmem_bytes >> 20} MiB VMEM")
    vmem_limit = None
    if vmem_bytes > 24 * 1024 * 1024:
        # Raise past the 32 MiB default scoped limit deliberately, with headroom.
        vmem_limit = min(int(vmem_bytes * 3 // 2), 60 * 1024 * 1024)

    return pl.pallas_call(
        _make_matmul_kernel(has_bias, leaky_relu),
        out_shape=jax.ShapeDtypeStruct((M, N), out_dtype),
        grid_spec=pltpu.PrefetchScalarGridSpec(
            num_scalar_prefetch=0,
            grid=(gi, gj, gk),
            in_specs=in_specs,
            out_specs=pl.BlockSpec((tm, tn), lambda i, j, k: (i, j)),
            scratch_shapes=[pltpu.VMEM((tm, tn), jnp.float32)],
        ),
        compiler_params=pltpu.CompilerParams(
            dimension_semantics=("parallel", "parallel", "arbitrary"),
            vmem_limit_bytes=vmem_limit),
        cost_estimate=pl.CostEstimate(flops=flops, transcendentals=0,
                                      bytes_accessed=bytes_accessed),
    )(*operands)


# ---------------------------------------------------------------------------
# Padding / tile-selection helpers
# ---------------------------------------------------------------------------
def _round_up(v, m):
    return ((v + m - 1) // m) * m


def _pad_to(x, shape):
    pads = [(0, s - d) for d, s in zip(x.shape, shape)]
    if any(p for _, p in pads):
        x = jnp.pad(x, pads)
    return x


def _pick_feat_tile(padded, cap=512):
    """Largest 128-multiple divisor of `padded` that is <= cap."""
    q = padded // 128
    for d in range(max(1, min(cap // 128, q)), 0, -1):
        if q % d == 0:
            return d * 128
    return 128


def _pick_node_tile(n_pad, cap=512):
    """Like _pick_feat_tile, but prefer >=2 tiles on the parallel i axis so
    v7x megacore shards row tiles across both TensorCores."""
    q = n_pad // 128
    max_d = max(1, min(cap // 128, q))
    for d in range(max_d, 0, -1):
        if q % d == 0 and q // d >= 2:
            return d * 128
    for d in range(max_d, 0, -1):
        if q % d == 0:
            return d * 128
    return 128


# ---------------------------------------------------------------------------
# Dense normalized adjacency (PyG gcn_norm, add_remaining_self_loops) in bf16
# ---------------------------------------------------------------------------
def build_gcn_adjacency_bf16(num_nodes, edge_index):
    n = num_nodes
    src0, dst0 = edge_index[0], edge_index[1]
    # add_remaining_self_loops: only add a self-loop to nodes lacking one
    # (weight 0 for the would-be duplicates -> no double counting).
    has_self = (jnp.zeros((n,), jnp.int32)
                .at[src0].max(jnp.where(src0 == dst0, 1, 0)) > 0)
    loop_w = jnp.where(has_self, 0.0, 1.0).astype(jnp.float32)

    src = jnp.concatenate([src0, jnp.arange(n, dtype=src0.dtype)])
    dst = jnp.concatenate([dst0, jnp.arange(n, dtype=dst0.dtype)])
    ew = jnp.concatenate([jnp.ones_like(src0, dtype=jnp.float32), loop_w])

    deg = jnp.zeros((n,), jnp.float32).at[dst].add(ew)
    dinv = jnp.where(deg > 0, lax.rsqrt(deg), 0.0)
    norm = dinv[src] * ew * dinv[dst]
    # aggregation: out[dst] += norm * x[src]  =>  A_hat[dst, src] = norm
    # Scatter directly into bf16 (no f32 N^2 densify-then-cast roundtrip).
    a_hat = (jnp.zeros((n, n), jnp.bfloat16)
             .at[dst, src].add(norm.astype(jnp.bfloat16)))
    return a_hat


# ---------------------------------------------------------------------------
# Full forward pass
# ---------------------------------------------------------------------------
@functools.partial(jax.jit, static_argnums=(4,))
def gcn_forward(x, edge_index, batch, params, num_graphs):
    """params = (w_in, b_in, [(w_c, b_c), ...], w_out, b_out); weights [in, out]."""
    w_in, b_in, conv_params, w_out, b_out = params
    num_nodes, input_size = x.shape

    a_hat = build_gcn_adjacency_bf16(num_nodes, edge_index)

    # ---- padded extents (node axis only to 128) and per-dim tile choices ----
    n_pad = _round_up(num_nodes, 128)
    node_t = _pick_node_tile(n_pad, cap=512)          # also K tile of aggregation
    fin_p = _round_up(input_size, 128)
    fin_t = _pick_feat_tile(fin_p, cap=512)
    h_dims = [w_in.shape[1]] + [w.shape[1] for w, _ in conv_params]
    h_pads = [_round_up(d, 128) for d in h_dims]
    h_tiles = [_pick_feat_tile(p, cap=512) for p in h_pads]
    # Aggregation j axis: cover the full hidden width so A_hat streams once.
    agg_tn = [_pick_feat_tile(p, cap=1024) for p in h_pads]

    # ---- lane-dense padded, bf16-cast operands (cast once, not per tile) ----
    x_p = _pad_to(x, (n_pad, fin_p)).astype(jnp.bfloat16)
    a_p = _pad_to(a_hat, (n_pad, n_pad))                       # already bf16
    w_in_p = _pad_to(w_in, (fin_p, h_pads[0])).astype(jnp.bfloat16)
    b_in_p = _pad_to(b_in.reshape(1, -1), (1, h_pads[0]))      # f32 epilogue
    conv_p = []
    for l, (w_c, b_c) in enumerate(conv_params):
        conv_p.append(
            (_pad_to(w_c, (h_pads[l], h_pads[l + 1])).astype(jnp.bfloat16),
             _pad_to(b_c.reshape(1, -1), (1, h_pads[l + 1]))))

    # ---- 1) input linear + leaky relu (Dropout(0.3) = identity in eval) -----
    h = tiled_matmul(x_p, w_in_p, b_in_p,
                     tm=node_t, tk=fin_t, tn=h_tiles[0],
                     leaky_relu=True, out_dtype=jnp.bfloat16)

    # ---- 2) GCNConv layers: XW, then A_hat @ (XW) + b, leaky relu -----------
    for l, (w_c_p, b_c_p) in enumerate(conv_p):
        xw = tiled_matmul(h, w_c_p, None,
                          tm=node_t, tk=h_tiles[l], tn=h_tiles[l + 1],
                          out_dtype=jnp.bfloat16)
        h = tiled_matmul(a_p, xw, b_c_p,
                         tm=node_t, tk=node_t, tn=agg_tn[l + 1],
                         leaky_relu=True, out_dtype=jnp.bfloat16)

    # ---- 3) global_mean_pool + output linear: tiny (num_graphs rows), so run
    #      as plain XLA ops instead of an MXU-wasting 8-row Pallas launch. ----
    h_real = h[:num_nodes, :h_dims[-1]].astype(jnp.float32)
    sums = jnp.zeros((num_graphs, h_dims[-1]), jnp.float32).at[batch].add(h_real)
    counts = jnp.zeros((num_graphs,), jnp.float32).at[batch].add(1.0)
    pooled = sums / jnp.maximum(counts[:, None], 1.0)
    return pooled @ w_out + b_out.reshape(1, -1)


# ---------------------------------------------------------------------------
# Parameter init (matches the PyTorch module's layer structure)
# ---------------------------------------------------------------------------
def init_params(key, input_size, hidden_sizes, output_size):
    keys = jax.random.split(key, 2 * (len(hidden_sizes) + 1))
    ki = iter(keys)

    def lin(k, fan_in, fan_out):
        return 0.1 * jax.random.normal(k, (fan_in, fan_out), jnp.float32)

    w_in = lin(next(ki), input_size, hidden_sizes[0])
    b_in = 0.1 * jax.random.normal(next(ki), (hidden_sizes[0],), jnp.float32)
    conv_params = []
    for i in range(len(hidden_sizes) - 1):
        w_c = lin(next(ki), hidden_sizes[i], hidden_sizes[i + 1])
        b_c = 0.1 * jax.random.normal(next(ki), (hidden_sizes[i + 1],), jnp.float32)
        conv_params.append((w_c, b_c))
    w_out = lin(next(ki), hidden_sizes[-1], output_size)
    b_out = 0.1 * jax.random.normal(next(ki), (output_size,), jnp.float32)
    return (w_in, b_in, conv_params, w_out, b_out)


if __name__ == "__main__":
    input_size = 8
    hidden_sizes = [32, 32]     # one GCNConv layer
    output_size = 4
    num_nodes = 16
    num_graphs = 2

    key = jax.random.PRNGKey(0)
    k_x, k_p = jax.random.split(key)

    x = jax.random.normal(k_x, (num_nodes, input_size), jnp.float32)

    # two ring graphs of 8 nodes each, undirected (both directions)
    def ring_edges(offset, n):
        src = jnp.arange(n) + offset
        dst = (jnp.arange(n) + 1) % n + offset
        return jnp.stack([jnp.concatenate([src, dst]),
                          jnp.concatenate([dst, src])], axis=0)

    edge_index = jnp.concatenate([ring_edges(0, 8), ring_edges(8, 8)],
                                 axis=1).astype(jnp.int32)
    batch = jnp.concatenate([jnp.zeros((8,), jnp.int32),
                             jnp.ones((8,), jnp.int32)])

    params = init_params(k_p, input_size, hidden_sizes, output_size)

    out = gcn_forward(x, edge_index, batch, params, num_graphs)
    jax.block_until_ready(out)
    assert out.shape == (num_graphs, output_size)
    print("KERNEL_OK")
</pallas_src>

<mosaic_0001>
module attributes {stable_mosaic.version = 11 : i64} {
  func.func private @main(%arg0: i32) attributes {dimension_semantics = [#tpu.dimension_semantics<core_parallel>], iteration_bounds = array<i64: 2>, tpu.core_type = #tpu.core_type<sc_scalar_subcore>, window_params = []} {
    return
  }
}

module attributes {stable_mosaic.version = 11 : i64} {
  func.func private @main(%arg0: i32) attributes {dimension_semantics = [#tpu.dimension_semantics<core_parallel>], iteration_bounds = array<i64: 2>, tpu.core_type = #tpu.core_type<sc_scalar_subcore>, window_params = []} {
    return
  }
}

module attributes {stable_mosaic.version = 11 : i64} {
  func.func @kernel(%arg0: i32, %arg1: i32, %arg2: i32, %arg3: memref<128x128xbf16, #tpu.memory_space<vmem>>, %arg4: memref<128x128xbf16, #tpu.memory_space<vmem>>, %arg5: memref<1x128xf32, #tpu.memory_space<vmem>>, %arg6: memref<128x128xbf16, #tpu.memory_space<vmem>>, %arg7: memref<128x128xf32, #tpu.memory_space<vmem>>) attributes {dimension_semantics = [#tpu.dimension_semantics<parallel>, #tpu.dimension_semantics<parallel>, #tpu.dimension_semantics<arbitrary>], iteration_bounds = array<i64: 1, 1, 1>, scalar_prefetch = 0 : i64, scratch_operands = 1 : i64, tpu.core_type = #tpu.core_type<tc>, window_params = [{transform_indices = @transform_0, window_bounds = array<i64: 128, 128>}, {transform_indices = @transform_1, window_bounds = array<i64: 128, 128>}, {transform_indices = @transform_2, window_bounds = array<i64: 1, 128>}, {transform_indices = @transform_3, window_bounds = array<i64: 128, 128>}]} {
    %c0_i32 = arith.constant 0 : i32
    %0 = arith.cmpi eq, %arg2, %c0_i32 : i32
    %1 = arith.extui %0 : i1 to i32
    %c0_i32_0 = arith.constant 0 : i32
    %2 = arith.cmpi ne, %1, %c0_i32_0 : i32
    scf.if %2 {
      %cst_10 = arith.constant 0.000000e+00 : f32
      %12 = vector.broadcast %cst_10 : f32 to vector<128x128xf32>
      %c0_11 = arith.constant 0 : index
      %c0_12 = arith.constant 0 : index
      %13 = vector.load %arg7[%c0_11, %c0_12] : memref<128x128xf32, #tpu.memory_space<vmem>>, vector<128x128xf32>
      tpu.vector_store %arg7[%c0_11, %c0_12], %12 {strides = array<i32>} : memref<128x128xf32, #tpu.memory_space<vmem>>, vector<128x128xf32>,
    } else {
    }
    %c0 = arith.constant 0 : index
    %c0_1 = arith.constant 0 : index
    %3 = vector.load %arg7[%c0, %c0_1] : memref<128x128xf32, #tpu.memory_space<vmem>>, vector<128x128xf32>
    %c0_2 = arith.constant 0 : index
    %c0_3 = arith.constant 0 : index
    %4 = vector.load %arg3[%c0_2, %c0_3] : memref<128x128xbf16, #tpu.memory_space<vmem>>, vector<128x128xbf16>
    %c0_4 = arith.constant 0 : index
    %c0_5 = arith.constant 0 : index
    %5 = vector.load %arg4[%c0_4, %c0_5] : memref<128x128xbf16, #tpu.memory_space<vmem>>, vector<128x128xbf16>
    %cst = arith.constant dense<0.000000e+00> : vector<128x128xf32>
    %6 = tpu.matmul %4, %5, %cst {dimension_numbers = #tpu.dot_dimension_numbers<[1], [0], [0], [1], [0, 0, 1, 1], [], []>} : vector<128x128xbf16>, vector<128x128xbf16>, vector<128x128xf32> -> vector<128x128xf32>
    %7 = arith.addf %3, %6 : vector<128x128xf32>
    %c0_6 = arith.constant 0 : index
    %c0_7 = arith.constant 0 : index
    %8 = vector.load %arg7[%c0_6, %c0_7] : memref<128x128xf32, #tpu.memory_space<vmem>>, vector<128x128xf32>
    tpu.vector_store %arg7[%c0_6, %c0_7], %7 {strides = array<i32>} : memref<128x128xf32, #tpu.memory_space<vmem>>, vector<128x128xf32>,
    %c0_i32_8 = arith.constant 0 : i32
    %9 = arith.cmpi eq, %arg2, %c0_i32_8 : i32
    %10 = arith.extui %9 : i1 to i32
    %c0_i32_9 = arith.constant 0 : i32
    %11 = arith.cmpi ne, %10, %c0_i32_9 : i32
    scf.if %11 {
      %c0_10 = arith.constant 0 : index
      %c0_11 = arith.constant 0 : index
      %12 = vector.load %arg7[%c0_10, %c0_11] : memref<128x128xf32, #tpu.memory_space<vmem>>, vector<128x128xf32>
      %c0_12 = arith.constant 0 : index
      %c0_13 = arith.constant 0 : index
      %13 = vector.load %arg5[%c0_12, %c0_13] : memref<1x128xf32, #tpu.memory_space<vmem>>, vector<1x128xf32>
      %14 = vector.broadcast %13 : vector<1x128xf32> to vector<128x128xf32>
      %15 = arith.addf %12, %14 : vector<128x128xf32>
      %cst_14 = arith.constant 0.000000e+00 : f32
      %16 = vector.broadcast %cst_14 : f32 to vector<128x128xf32>
      %17 = arith.cmpf oge, %15, %16 : vector<128x128xf32>
      %cst_15 = arith.constant 4.000000e-01 : f32
      %18 = vector.broadcast %cst_15 : f32 to vector<128x128xf32>
      %19 = arith.mulf %18, %15 : vector<128x128xf32>
      %20 = arith.select %17, %15, %19 : vector<128x128xi1>, vector<128x128xf32>
      %21 = arith.truncf %20 : vector<128x128xf32> to vector<128x128xbf16>
      %c0_16 = arith.constant 0 : index
      %c0_17 = arith.constant 0 : index
      %22 = vector.load %arg6[%c0_16, %c0_17] : memref<128x128xbf16, #tpu.memory_space<vmem>>, vector<128x128xbf16>
      tpu.vector_store %arg6[%c0_16, %c0_17], %21 {strides = array<i32>} : memref<128x128xbf16, #tpu.memory_space<vmem>>, vector<128x128xbf16>,
    } else {
    }
    return
  }
  func.func @transform_0(%arg0: i32, %arg1: i32, %arg2: i32) -> (i32, i32) {
    %c0_i32 = arith.constant 0 : i32
    return %arg0, %arg2 : i32, i32
  }
  func.func @transform_1(%arg0: i32, %arg1: i32, %arg2: i32) -> (i32, i32) {
    %c0_i32 = arith.constant 0 : i32
    return %arg2, %arg1 : i32, i32
  }
  func.func @transform_2(%arg0: i32, %arg1: i32, %arg2: i32) -> (i32, i32) {
    %c0_i32 = arith.constant 0 : i32
    %c0_i32_0 = arith.constant 0 : i32
    return %c0_i32, %arg1 : i32, i32
  }
  func.func @transform_3(%arg0: i32, %arg1: i32, %arg2: i32) -> (i32, i32) {
    %c0_i32 = arith.constant 0 : i32
    return %arg0, %arg1 : i32, i32
  }
}

module attributes {stable_mosaic.version = 11 : i64} {
  func.func @kernel(%arg0: i32, %arg1: i32, %arg2: i32, %arg3: memref<128x128xbf16, #tpu.memory_space<vmem>>, %arg4: memref<128x128xbf16, #tpu.memory_space<vmem>>, %arg5: memref<128x128xbf16, #tpu.memory_space<vmem>>, %arg6: memref<128x128xf32, #tpu.memory_space<vmem>>) attributes {dimension_semantics = [#tpu.dimension_semantics<parallel>, #tpu.dimension_semantics<parallel>, #tpu.dimension_semantics<arbitrary>], iteration_bounds = array<i64: 1, 1, 1>, scalar_prefetch = 0 : i64, scratch_operands = 1 : i64, tpu.core_type = #tpu.core_type<tc>, window_params = [{transform_indices = @transform_0, window_bounds = array<i64: 128, 128>}, {transform_indices = @transform_1, window_bounds = array<i64: 128, 128>}, {transform_indices = @transform_2, window_bounds = array<i64: 128, 128>}]} {
    %c0_i32 = arith.constant 0 : i32
    %0 = arith.cmpi eq, %arg2, %c0_i32 : i32
    %1 = arith.extui %0 : i1 to i32
    %c0_i32_0 = arith.constant 0 : i32
    %2 = arith.cmpi ne, %1, %c0_i32_0 : i32
    scf.if %2 {
      %cst_10 = arith.constant 0.000000e+00 : f32
      %12 = vector.broadcast %cst_10 : f32 to vector<128x128xf32>
      %c0_11 = arith.constant 0 : index
      %c0_12 = arith.constant 0 : index
      %13 = vector.load %arg6[%c0_11, %c0_12] : memref<128x128xf32, #tpu.memory_space<vmem>>, vector<128x128xf32>
      tpu.vector_store %arg6[%c0_11, %c0_12], %12 {strides = array<i32>} : memref<128x128xf32, #tpu.memory_space<vmem>>, vector<128x128xf32>,
    } else {
    }
    %c0 = arith.constant 0 : index
    %c0_1 = arith.constant 0 : index
    %3 = vector.load %arg6[%c0, %c0_1] : memref<128x128xf32, #tpu.memory_space<vmem>>, vector<128x128xf32>
    %c0_2 = arith.constant 0 : index
    %c0_3 = arith.constant 0 : index
    %4 = vector.load %arg3[%c0_2, %c0_3] : memref<128x128xbf16, #tpu.memory_space<vmem>>, vector<128x128xbf16>
    %c0_4 = arith.constant 0 : index
    %c0_5 = arith.constant 0 : index
    %5 = vector.load %arg4[%c0_4, %c0_5] : memref<128x128xbf16, #tpu.memory_space<vmem>>, vector<128x128xbf16>
    %cst = arith.constant dense<0.000000e+00> : vector<128x128xf32>
    %6 = tpu.matmul %4, %5, %cst {dimension_numbers = #tpu.dot_dimension_numbers<[1], [0], [0], [1], [0, 0, 1, 1], [], []>} : vector<128x128xbf16>, vector<128x128xbf16>, vector<128x128xf32> -> vector<128x128xf32>
    %7 = arith.addf %3, %6 : vector<128x128xf32>
    %c0_6 = arith.constant 0 : index
    %c0_7 = arith.constant 0 : index
    %8 = vector.load %arg6[%c0_6, %c0_7] : memref<128x128xf32, #tpu.memory_space<vmem>>, vector<128x128xf32>
    tpu.vector_store %arg6[%c0_6, %c0_7], %7 {strides = array<i32>} : memref<128x128xf32, #tpu.memory_space<vmem>>, vector<128x128xf32>,
    %c0_i32_8 = arith.constant 0 : i32
    %9 = arith.cmpi eq, %arg2, %c0_i32_8 : i32
    %10 = arith.extui %9 : i1 to i32
    %c0_i32_9 = arith.constant 0 : i32
    %11 = arith.cmpi ne, %10, %c0_i32_9 : i32
    scf.if %11 {
      %c0_10 = arith.constant 0 : index
      %c0_11 = arith.constant 0 : index
      %12 = vector.load %arg6[%c0_10, %c0_11] : memref<128x128xf32, #tpu.memory_space<vmem>>, vector<128x128xf32>
      %13 = arith.truncf %12 : vector<128x128xf32> to vector<128x128xbf16>
      %c0_12 = arith.constant 0 : index
      %c0_13 = arith.constant 0 : index
      %14 = vector.load %arg5[%c0_12, %c0_13] : memref<128x128xbf16, #tpu.memory_space<vmem>>, vector<128x128xbf16>
      tpu.vector_store %arg5[%c0_12, %c0_13], %13 {strides = array<i32>} : memref<128x128xbf16, #tpu.memory_space<vmem>>, vector<128x128xbf16>,
    } else {
    }
    return
  }
  func.func @transform_0(%arg0: i32, %arg1: i32, %arg2: i32) -> (i32, i32) {
    %c0_i32 = arith.constant 0 : i32
    return %arg0, %arg2 : i32, i32
  }
  func.func @transform_1(%arg0: i32, %arg1: i32, %arg2: i32) -> (i32, i32) {
    %c0_i32 = arith.constant 0 : i32
    return %arg2, %arg1 : i32, i32
  }
  func.func @transform_2(%arg0: i32, %arg1: i32, %arg2: i32) -> (i32, i32) {
    %c0_i32 = arith.constant 0 : i32
    return %arg0, %arg1 : i32, i32
  }
}

</mosaic_0001>

<llo_original>
// kernel: gcn_forward.3
$region0: #{gcn_forward.3}
  #allocation0 [shape = 'u32[]', space=smem, size = 0x4, offset = 0x4, fixed_abs, tag = 'smem constant byte address 0x4 - core index']
  #allocation1 [shape = 'u32[144,128]{1,0:T(1,128)}', space=vmem, size = 0x12000, scoped, tag = 'internal scratch']
  #allocation2 [shape = 'f32[128,128]{1,0:T(8,128)}', space=vmem, size = 0x10000, scoped, tag = 'scratch operand']
  %s0 = inlined_call_operand.vmem [shape: bf16[128,128], index: 0, kind: input, shape index: {}]
  %s1 = inlined_call_operand.vmem [shape: bf16[128,128], index: 1, kind: input, shape index: {}]
  %s2 = inlined_call_operand.vmem [shape: f32[1,128], index: 2, kind: input, shape index: {}]
  %s3 = inlined_call_operand.vmem [shape: bf16[128,128], index: 3, kind: output, shape index: {}]
  %s4 = sld [smem:[#allocation0]]
  $region30: #{gcn_forward.3} parent=0
    _
  %s6 = ssub.s32 1, %s4
  %s7 = scalar_select 0, %s6, %s4
  // Predicated region
  $region2: #{gcn_forward.3} parent=0 // pred_check
    _
  $region3: #{gcn_forward.3} parent=0 // pred_check_branch
    %9 = sbr.rel (0) target = $region5
  $region4: #{gcn_forward.3} parent=0 // pred_region
    _
  $region5: #{gcn_forward.3} parent=0 // pred_fallthru
    _
  // Predicated region
  $region6: #{gcn_forward.3} parent=0 // pred_check
    _
  $region7: #{gcn_forward.3} parent=0 // pred_check_branch
    %11 = sbr.rel (0) target = $region9
  $region8: #{gcn_forward.3} parent=0 // pred_region
    _
  $region9: #{gcn_forward.3} parent=0 // pred_fallthru
    _
  // Predicated region
  $region10: #{gcn_forward.3} parent=0 // pred_check
    _
  $region11: #{gcn_forward.3} parent=0 // pred_check_branch
    %13 = sbr.rel (0) target = $region13
  $region12: #{gcn_forward.3} parent=0 // pred_region
    _
  $region13: #{gcn_forward.3} parent=0 // pred_fallthru
    _
  %p15 = scmp.eq.s32.totalorder 0, 0
  // Predicated region
  $region14: #{gcn_forward.3} parent=0 // pred_check
    %p16 = pneg %p15
  $region15: #{gcn_forward.3} parent=0 // pred_check_branch
    %18 = sbr.rel (%p16) target = $region17
  $region16: #{gcn_forward.3} parent=0 // pred_region
    %19 = vst [vmem:[#allocation2] sm:$0xff] 0.0
    %20 = vst [vmem:[#allocation2 + $0x8] sm:$0xff] 0.0
    %21 = vst [vmem:[#allocation2 + $0x10] sm:$0xff] 0.0
    %22 = vst [vmem:[#allocation2 + $0x18] sm:$0xff] 0.0
    %23 = vst [vmem:[#allocation2 + $0x20] sm:$0xff] 0.0
    %24 = vst [vmem:[#allocation2 + $0x28] sm:$0xff] 0.0
    %25 = vst [vmem:[#allocation2 + $0x30] sm:$0xff] 0.0
    %26 = vst [vmem:[#allocation2 + $0x38] sm:$0xff] 0.0
    %27 = vst [vmem:[#allocation2 + $0x40] sm:$0xff] 0.0
    %28 = vst [vmem:[#allocation2 + $0x48] sm:$0xff] 0.0
    %29 = vst [vmem:[#allocation2 + $0x50] sm:$0xff] 0.0
    %30 = vst [vmem:[#allocation2 + $0x58] sm:$0xff] 0.0
    %31 = vst [vmem:[#allocation2 + $0x60] sm:$0xff] 0.0
    %32 = vst [vmem:[#allocation2 + $0x68] sm:$0xff] 0.0
    %33 = vst [vmem:[#allocation2 + $0x70] sm:$0xff] 0.0
    %34 = vst [vmem:[#allocation2 + $0x78] sm:$0xff] 0.0
  $region17: #{gcn_forward.3} parent=0 // pred_fallthru
    _
  %v35 = vld [vmem:[#allocation2] sm:$0xff]
  %v36 = vld [vmem:[#allocation2 + $0x8] sm:$0xff]
  %v37 = vld [vmem:[#allocation2 + $0x10] sm:$0xff]
  %v38 = vld [vmem:[#allocation2 + $0x18] sm:$0xff]
  %v39 = vld [vmem:[#allocation2 + $0x20] sm:$0xff]
  %v40 = vld [vmem:[#allocation2 + $0x28] sm:$0xff]
  %v41 = vld [vmem:[#allocation2 + $0x30] sm:$0xff]
  %v42 = vld [vmem:[#allocation2 + $0x38] sm:$0xff]
  %v43 = vld [vmem:[#allocation2 + $0x40] sm:$0xff]
  %v44 = vld [vmem:[#allocation2 + $0x48] sm:$0xff]
  %v45 = vld [vmem:[#allocation2 + $0x50] sm:$0xff]
  %v46 = vld [vmem:[#allocation2 + $0x58] sm:$0xff]
  %v47 = vld [vmem:[#allocation2 + $0x60] sm:$0xff]
  %v48 = vld [vmem:[#allocation2 + $0x68] sm:$0xff]
  %v49 = vld [vmem:[#allocation2 + $0x70] sm:$0xff]
  %v50 = vld [vmem:[#allocation2 + $0x78] sm:$0xff]
  %v51 = vld [vmem:[%s0] sm:$0xf]
  %v52 = vld [vmem:[%s0 + $0x4] sm:$0xf]
  %v53 = vld [vmem:[%s0 + $0x8] sm:$0xf]
  %v54 = vld [vmem:[%s0 + $0xc] sm:$0xf]
  %v55 = vld [vmem:[%s0 + $0x10] sm:$0xf]
  %v56 = vld [vmem:[%s0 + $0x14] sm:$0xf]
  %v57 = vld [vmem:[%s0 + $0x18] sm:$0xf]
  %v58 = vld [vmem:[%s0 + $0x1c] sm:$0xf]
  %v59 = vld [vmem:[%s0 + $0x20] sm:$0xf]
  %v60 = vld [vmem:[%s0 + $0x24] sm:$0xf]
  %v61 = vld [vmem:[%s0 + $0x28] sm:$0xf]
  %v62 = vld [vmem:[%s0 + $0x2c] sm:$0xf]
  %v63 = vld [vmem:[%s0 + $0x30] sm:$0xf]
  %v64 = vld [vmem:[%s0 + $0x34] sm:$0xf]
  %v65 = vld [vmem:[%s0 + $0x38] sm:$0xf]
  %v66 = vld [vmem:[%s0 + $0x3c] sm:$0xf]
  %v67 = vld [vmem:[%s1] sm:$0xf]
  %v68 = vld [vmem:[%s1 + $0x4] sm:$0xf]
  %v69 = vld [vmem:[%s1 + $0x8] sm:$0xf]
  %v70 = vld [vmem:[%s1 + $0xc] sm:$0xf]
  %v71 = vld [vmem:[%s1 + $0x10] sm:$0xf]
  %v72 = vld [vmem:[%s1 + $0x14] sm:$0xf]
  %v73 = vld [vmem:[%s1 + $0x18] sm:$0xf]
  %v74 = vld [vmem:[%s1 + $0x1c] sm:$0xf]
  %v75 = vld [vmem:[%s1 + $0x20] sm:$0xf]
  %v76 = vld [vmem:[%s1 + $0x24] sm:$0xf]
  %v77 = vld [vmem:[%s1 + $0x28] sm:$0xf]
  %v78 = vld [vmem:[%s1 + $0x2c] sm:$0xf]
  %v79 = vld [vmem:[%s1 + $0x30] sm:$0xf]
  %v80 = vld [vmem:[%s1 + $0x34] sm:$0xf]
  %v81 = vld [vmem:[%s1 + $0x38] sm:$0xf]
  %v82 = vld [vmem:[%s1 + $0x3c] sm:$0xf]
  %v99 = vunpack.c.l.b16 %v51
  %v100 = vunpack.c.l.b16 %v52
  %v101 = vunpack.c.l.b16 %v53
  %v102 = vunpack.c.l.b16 %v54
  %v103 = vunpack.c.l.b16 %v55
  %v104 = vunpack.c.l.b16 %v56
  %v105 = vunpack.c.l.b16 %v57
  %v106 = vunpack.c.l.b16 %v58
  %v107 = vunpack.c.l.b16 %v59
  %v108 = vunpack.c.l.b16 %v60
  %v109 = vunpack.c.l.b16 %v61
  %v110 = vunpack.c.l.b16 %v62
  %v111 = vunpack.c.l.b16 %v63
  %v112 = vunpack.c.l.b16 %v64
  %v113 = vunpack.c.l.b16 %v65
  %v114 = vunpack.c.l.b16 %v66
  %v115 = vpack.c.b16 %v100, %v99
  %v116 = vpack.c.b16 %v102, %v101
  %v117 = vpack.c.b16 %v104, %v103
  %v118 = vpack.c.b16 %v106, %v105
  %v119 = vpack.c.b16 %v108, %v107
  %v120 = vpack.c.b16 %v110, %v109
  %v121 = vpack.c.b16 %v112, %v111
  %v122 = vpack.c.b16 %v114, %v113
  %v147 = vunpack.c.l.b16 %v67
  %v148 = vunpack.c.l.b16 %v68
  %v149 = vunpack.c.l.b16 %v69
  %v150 = vunpack.c.l.b16 %v70
  %v151 = vunpack.c.l.b16 %v71
  %v152 = vunpack.c.l.b16 %v72
  %v153 = vunpack.c.l.b16 %v73
  %v154 = vunpack.c.l.b16 %v74
  %v155 = vunpack.c.l.b16 %v75
  %v156 = vunpack.c.l.b16 %v76
  %v157 = vunpack.c.l.b16 %v77
  %v158 = vunpack.c.l.b16 %v78
  %v159 = vunpack.c.l.b16 %v79
  %v160 = vunpack.c.l.b16 %v80
  %v161 = vunpack.c.l.b16 %v81
  %v162 = vunpack.c.l.b16 %v82
  %v163 = vpack.c.b16 %v148, %v147
  %v164 = vpack.c.b16 %v150, %v149
  %v165 = vpack.c.b16 %v152, %v151
  %v166 = vpack.c.b16 %v154, %v153
  %v167 = vpack.c.b16 %v156, %v155
  %v168 = vpack.c.b16 %v158, %v157
  %v169 = vpack.c.b16 %v160, %v159
  %v170 = vpack.c.b16 %v162, %v161
  %179 = vmatprep.subr.bf16.mxu0 0
  %180 = vmatpush1.bf16.msra.mxu0 %v163
  %181 = vmatprep.subr.bf16.mxu0 0
  %182 = vmatpush1.bf16.msra.mxu0 %v164
  %183 = vmatprep.subr.bf16.mxu0 0
  %184 = vmatpush1.bf16.msra.mxu0 %v165
  %185 = vmatprep.subr.bf16.mxu0 0
  %186 = vmatpush1.bf16.msra.mxu0 %v166
  %187 = vmatprep.subr.bf16.mxu0 0
  %188 = vmatpush1.bf16.msra.mxu0 %v167
  %189 = vmatprep.subr.bf16.mxu0 0
  %190 = vmatpush1.bf16.msra.mxu0 %v168
  %191 = vmatprep.subr.bf16.mxu0 0
  %192 = vmatpush1.bf16.msra.mxu0 %v169
  %193 = vmatprep.subr.bf16.mxu0 0
  %194 = vmatpush1.bf16.msra.mxu0 %v170
  %195 = vmatprep.subr.bf16.mxu0 0
  %196 = vmatpush1.bf16.msra.mxu0 0
  %197 = vmatprep.subr.bf16.mxu0 0
  %198 = vmatpush1.bf16.msra.mxu0 0
  %199 = vmatprep.subr.bf16.mxu0 0
  %200 = vmatpush1.bf16.msra.mxu0 0
  %201 = vmatprep.subr.bf16.mxu0 0
  %202 = vmatpush1.bf16.msra.mxu0 0
  %203 = vmatprep.subr.bf16.mxu0 0
  %204 = vmatpush1.bf16.msra.mxu0 0
  %205 = vmatprep.subr.bf16.mxu0 0
  %206 = vmatpush1.bf16.msra.mxu0 0
  %207 = vmatprep.subr.bf16.mxu0 0
  %208 = vmatpush1.bf16.msra.mxu0 0
  %209 = vmatprep.subr.bf16.mxu0 0
  %210 = vmatpush1.bf16.msra.mxu0 0
  %211 = vmatprep.mubr.bf16.mxu0 0
  %212 = vmatmul.mubr.bf16.gmra.mrb[0].mxu0 %v115
  %v213 = vpop.f32.mrb[0].mxu0
  %v214 = vadd.f32 0.0, %v213
  %v215 = vpop.f32.mrb[0].mxu0
  %v216 = vpop.f32.mrb[0].mxu0
  %v217 = vadd.f32 0.0, %v216
  %v218 = vpop.f32.mrb[0].mxu0
  %219 = vmatprep.mubr.bf16.mxu0 0
  %220 = vmatmul.mubr.bf16.gmra.mrb[0].mxu0 %v116
  %v221 = vpop.f32.mrb[0].mxu0
  %v222 = vadd.f32 0.0, %v221
  %v223 = vpop.f32.mrb[0].mxu0
  %v224 = vpop.f32.mrb[0].mxu0
  %v225 = vadd.f32 0.0, %v224
  %v226 = vpop.f32.mrb[0].mxu0
  %227 = vmatprep.mubr.bf16.mxu0 0
  %228 = vmatmul.mubr.bf16.gmra.mrb[0].mxu0 %v117
  %v229 = vpop.f32.mrb[0].mxu0
  %v230 = vadd.f32 0.0, %v229
  %v231 = vpop.f32.mrb[0].mxu0
  %v232 = vpop.f32.mrb[0].mxu0
  %v233 = vadd.f32 0.0, %v232
  %v234 = vpop.f32.mrb[0].mxu0
  %235 = vmatprep.mubr.bf16.mxu0 0
  %236 = vmatmul.mubr.bf16.gmra.mrb[0].mxu0 %v118
  %v237 = vpop.f32.mrb[0].mxu0
  %v238 = vadd.f32 0.0, %v237
  %v239 = vpop.f32.mrb[0].mxu0
  %v240 = vpop.f32.mrb[0].mxu0
  %v241 = vadd.f32 0.0, %v240
  %v242 = vpop.f32.mrb[0].mxu0
  %243 = vmatprep.mubr.bf16.mxu0 0
  %244 = vmatmul.mubr.bf16.gmra.mrb[0].mxu0 %v119
  %v245 = vpop.f32.mrb[0].mxu0
  %v246 = vadd.f32 0.0, %v245
  %v247 = vpop.f32.mrb[0].mxu0
  %v248 = vpop.f32.mrb[0].mxu0
  %v249 = vadd.f32 0.0, %v248
  %v250 = vpop.f32.mrb[0].mxu0
  %251 = vmatprep.mubr.bf16.mxu0 0
  %252 = vmatmul.mubr.bf16.gmra.mrb[0].mxu0 %v120
  %v253 = vpop.f32.mrb[0].mxu0
  %v254 = vadd.f32 0.0, %v253
  %v255 = vpop.f32.mrb[0].mxu0
  %v256 = vpop.f32.mrb[0].mxu0
  %v257 = vadd.f32 0.0, %v256
  %v258 = vpop.f32.mrb[0].mxu0
  %259 = vmatprep.mubr.bf16.mxu0 0
  %260 = vmatmul.mubr.bf16.gmra.mrb[0].mxu0 %v121
  %v261 = vpop.f32.mrb[0].mxu0
  %v262 = vadd.f32 0.0, %v261
  %v263 = vpop.f32.mrb[0].mxu0
  %v264 = vpop.f32.mrb[0].mxu0
  %v265 = vadd.f32 0.0, %v264
  %v266 = vpop.f32.mrb[0].mxu0
  %267 = vmatprep.mubr.bf16.mxu0 0
  %268 = vmatmul.mubr.bf16.gmra.mrb[0].mxu0 %v122
  %v269 = vpop.f32.mrb[0].mxu0
  %v270 = vadd.f32 0.0, %v269
  %v271 = vpop.f32.mrb[0].mxu0
  %v272 = vpop.f32.mrb[0].mxu0
  %v273 = vadd.f32 0.0, %v272
  %v274 = vpop.f32.mrb[0].mxu0
  %275 = vdwg.mxu0
  %v276 = vadd.f32 %v35, %v214
  %v277 = vadd.f32 %v36, %v217
  %v278 = vadd.f32 %v37, %v222
  %v279 = vadd.f32 %v38, %v225
  %v280 = vadd.f32 %v39, %v230
  %v281 = vadd.f32 %v40, %v233
  %v282 = vadd.f32 %v41, %v238
  %v283 = vadd.f32 %v42, %v241
  %v284 = vadd.f32 %v43, %v246
  %v285 = vadd.f32 %v44, %v249
  %v286 = vadd.f32 %v45, %v254
  %v287 = vadd.f32 %v46, %v257
  %v288 = vadd.f32 %v47, %v262
  %v289 = vadd.f32 %v48, %v265
  %v290 = vadd.f32 %v49, %v270
  %v291 = vadd.f32 %v50, %v273
  %292 = vst [vmem:[#allocation2] sm:$0xff] %v276
  %293 = vst [vmem:[#allocation2 + $0x8] sm:$0xff] %v277
  %294 = vst [vmem:[#allocation2 + $0x10] sm:$0xff] %v278
  %295 = vst [vmem:[#allocation2 + $0x18] sm:$0xff] %v279
  %296 = vst [vmem:[#allocation2 + $0x20] sm:$0xff] %v280
  %297 = vst [vmem:[#allocation2 + $0x28] sm:$0xff] %v281
  %298 = vst [vmem:[#allocation2 + $0x30] sm:$0xff] %v282
  %299 = vst [vmem:[#allocation2 + $0x38] sm:$0xff] %v283
  %300 = vst [vmem:[#allocation2 + $0x40] sm:$0xff] %v284
  %301 = vst [vmem:[#allocation2 + $0x48] sm:$0xff] %v285
  %302 = vst [vmem:[#allocation2 + $0x50] sm:$0xff] %v286
  %303 = vst [vmem:[#allocation2 + $0x58] sm:$0xff] %v287
  %304 = vst [vmem:[#allocation2 + $0x60] sm:$0xff] %v288
  %305 = vst [vmem:[#allocation2 + $0x68] sm:$0xff] %v289
  %306 = vst [vmem:[#allocation2 + $0x70] sm:$0xff] %v290
  %307 = vst [vmem:[#allocation2 + $0x78] sm:$0xff] %v291
  // Predicated region
  $region18: #{gcn_forward.3} parent=0 // pred_check
    %p308 = pneg %p15
  $region19: #{gcn_forward.3} parent=0 // pred_check_branch
    %310 = sbr.rel (%p308) target = $region21
  $region20: #{gcn_forward.3} parent=0 // pred_region
    %v311 = vld [vmem:[#allocation2] sm:$0xff]
    %v312 = vld [vmem:[#allocation2 + $0x8] sm:$0xff]
    %v313 = vld [vmem:[#allocation2 + $0x10] sm:$0xff]
    %v314 = vld [vmem:[#allocation2 + $0x18] sm:$0xff]
    %v315 = vld [vmem:[#allocation2 + $0x20] sm:$0xff]
    %v316 = vld [vmem:[#allocation2 + $0x28] sm:$0xff]
    %v317 = vld [vmem:[#allocation2 + $0x30] sm:$0xff]
    %v318 = vld [vmem:[#allocation2 + $0x38] sm:$0xff]
    %v319 = vld [vmem:[#allocation2 + $0x40] sm:$0xff]
    %v320 = vld [vmem:[#allocation2 + $0x48] sm:$0xff]
    %v321 = vld [vmem:[#allocation2 + $0x50] sm:$0xff]
    %v322 = vld [vmem:[#allocation2 + $0x58] sm:$0xff]
    %v323 = vld [vmem:[#allocation2 + $0x60] sm:$0xff]
    %v324 = vld [vmem:[#allocation2 + $0x68] sm:$0xff]
    %v325 = vld [vmem:[#allocation2 + $0x70] sm:$0xff]
    %v326 = vld [vmem:[#allocation2 + $0x78] sm:$0xff]
    %v327 = vld [vmem:[%s2] sm:$0x1]
    %v329 = vlaneseq
    %v330 = vshrl.u32 %v329, 7
    %v331 = vsub.s32 0, %v330
    %v332 = vrot.slane %v327, %v331
    %v334 = vadd.f32 %v311, %v332
    %v335 = vadd.f32 %v312, %v332
    %v336 = vadd.f32 %v313, %v332
    %v337 = vadd.f32 %v314, %v332
    %v338 = vadd.f32 %v315, %v332
    %v339 = vadd.f32 %v316, %v332
    %v340 = vadd.f32 %v317, %v332
    %v341 = vadd.f32 %v318, %v332
    %v342 = vadd.f32 %v319, %v332
    %v343 = vadd.f32 %v320, %v332
    %v344 = vadd.f32 %v321, %v332
    %v345 = vadd.f32 %v322, %v332
    %v346 = vadd.f32 %v323, %v332
    %v347 = vadd.f32 %v324, %v332
    %v348 = vadd.f32 %v325, %v332
    %v349 = vadd.f32 %v326, %v332
    %vm350 = vcmp.ge.f32.partialorder %v334, 0.0
    %vm351 = vcmp.ge.f32.partialorder %v335, 0.0
    %vm352 = vcmp.ge.f32.partialorder %v336, 0.0
    %vm353 = vcmp.ge.f32.partialorder %v337, 0.0
    %vm354 = vcmp.ge.f32.partialorder %v338, 0.0
    %vm355 = vcmp.ge.f32.partialorder %v339, 0.0
    %vm356 = vcmp.ge.f32.partialorder %v340, 0.0
    %vm357 = vcmp.ge.f32.partialorder %v341, 0.0
    %vm358 = vcmp.ge.f32.partialorder %v342, 0.0
    %vm359 = vcmp.ge.f32.partialorder %v343, 0.0
    %vm360 = vcmp.ge.f32.partialorder %v344, 0.0
    %vm361 = vcmp.ge.f32.partialorder %v345, 0.0
    %vm362 = vcmp.ge.f32.partialorder %v346, 0.0
    %vm363 = vcmp.ge.f32.partialorder %v347, 0.0
    %vm364 = vcmp.ge.f32.partialorder %v348, 0.0
    %vm365 = vcmp.ge.f32.partialorder %v349, 0.0
    %v366 = vmul.f32 %v334, 0.4
    %v367 = vmul.f32 %v335, 0.4
    %v368 = vmul.f32 %v336, 0.4
    %v369 = vmul.f32 %v337, 0.4
    %v370 = vmul.f32 %v338, 0.4
    %v371 = vmul.f32 %v339, 0.4
    %v372 = vmul.f32 %v340, 0.4
    %v373 = vmul.f32 %v341, 0.4
    %v374 = vmul.f32 %v342, 0.4
    %v375 = vmul.f32 %v343, 0.4
    %v376 = vmul.f32 %v344, 0.4
    %v377 = vmul.f32 %v345, 0.4
    %v378 = vmul.f32 %v346, 0.4
    %v379 = vmul.f32 %v347, 0.4
    %v380 = vmul.f32 %v348, 0.4
    %v381 = vmul.f32 %v349, 0.4
    %v382 = vsel %vm350, %v334, %v366
    %v383 = vsel %vm351, %v335, %v367
    %v384 = vsel %vm352, %v336, %v368
    %v385 = vsel %vm353, %v337, %v369
    %v386 = vsel %vm354, %v338, %v370
    %v387 = vsel %vm355, %v339, %v371
    %v388 = vsel %vm356, %v340, %v372
    %v389 = vsel %vm357, %v341, %v373
    %v390 = vsel %vm358, %v342, %v374
    %v391 = vsel %vm359, %v343, %v375
    %v392 = vsel %vm360, %v344, %v376
    %v393 = vsel %vm361, %v345, %v377
    %v394 = vsel %vm362, %v346, %v378
    %v395 = vsel %vm363, %v347, %v379
    %v396 = vsel %vm364, %v348, %v380
    %v397 = vsel %vm365, %v349, %v381
    %v398 = vpack.c.bf16 %v383, %v382
    %v399 = vpack.c.bf16 %v385, %v384
    %v400 = vpack.c.bf16 %v387, %v386
    %v401 = vpack.c.bf16 %v389, %v388
    %v402 = vpack.c.bf16 %v391, %v390
    %v403 = vpack.c.bf16 %v393, %v392
    %v404 = vpack.c.bf16 %v395, %v394
    %v405 = vpack.c.bf16 %v397, %v396
    %v414 = vunpack.c.l.b16 %v398
    %v415 = vunpack.c.h.b16 %v398
    %v416 = vunpack.c.l.b16 %v399
    %v417 = vunpack.c.h.b16 %v399
    %v418 = vunpack.c.l.b16 %v400
    %v419 = vunpack.c.h.b16 %v400
    %v420 = vunpack.c.l.b16 %v401
    %v421 = vunpack.c.h.b16 %v401
    %v422 = vunpack.c.l.b16 %v402
    %v423 = vunpack.c.h.b16 %v402
    %v424 = vunpack.c.l.b16 %v403
    %v425 = vunpack.c.h.b16 %v403
    %v426 = vunpack.c.l.b16 %v404
    %v427 = vunpack.c.h.b16 %v404
    %v428 = vunpack.c.l.b16 %v405
    %v429 = vunpack.c.h.b16 %v405
    %v430 = vpack.c.b16 %v414, %v414
    %v431 = vpack.c.b16 %v415, %v415
    %v432 = vpack.c.b16 %v416, %v416
    %v433 = vpack.c.b16 %v417, %v417
    %v434 = vpack.c.b16 %v418, %v418
    %v435 = vpack.c.b16 %v419, %v419
    %v436 = vpack.c.b16 %v420, %v420
    %v437 = vpack.c.b16 %v421, %v421
    %v438 = vpack.c.b16 %v422, %v422
    %v439 = vpack.c.b16 %v423, %v423
    %v440 = vpack.c.b16 %v424, %v424
    %v441 = vpack.c.b16 %v425, %v425
    %v442 = vpack.c.b16 %v426, %v426
    %v443 = vpack.c.b16 %v427, %v427
    %v444 = vpack.c.b16 %v428, %v428
    %v445 = vpack.c.b16 %v429, %v429
    %462 = vst [vmem:[%s3] sm:$0xf] %v430
    %463 = vst [vmem:[%s3 + $0x4] sm:$0xf] %v431
    %464 = vst [vmem:[%s3 + $0x8] sm:$0xf] %v432
    %465 = vst [vmem:[%s3 + $0xc] sm:$0xf] %v433
    %466 = vst [vmem:[%s3 + $0x10] sm:$0xf] %v434
    %467 = vst [vmem:[%s3 + $0x14] sm:$0xf] %v435
    %468 = vst [vmem:[%s3 + $0x18] sm:$0xf] %v436
    %469 = vst [vmem:[%s3 + $0x1c] sm:$0xf] %v437
    %470 = vst [vmem:[%s3 + $0x20] sm:$0xf] %v438
    %471 = vst [vmem:[%s3 + $0x24] sm:$0xf] %v439
    %472 = vst [vmem:[%s3 + $0x28] sm:$0xf] %v440
    %473 = vst [vmem:[%s3 + $0x2c] sm:$0xf] %v441
    %474 = vst [vmem:[%s3 + $0x30] sm:$0xf] %v442
    %475 = vst [vmem:[%s3 + $0x34] sm:$0xf] %v443
    %476 = vst [vmem:[%s3 + $0x38] sm:$0xf] %v444
    %477 = vst [vmem:[%s3 + $0x3c] sm:$0xf] %v445
  $region21: #{gcn_forward.3} parent=0 // pred_fallthru
    _
  // Predicated region
  $region22: #{gcn_forward.3} parent=0 // pred_check
    _
  $region23: #{gcn_forward.3} parent=0 // pred_check_branch
    %479 = sbr.rel (0) target = $region25
  $region24: #{gcn_forward.3} parent=0 // pred_region
    _
  $region25: #{gcn_forward.3} parent=0 // pred_fallthru
    _
  // Predicated region
  $region26: #{gcn_forward.3} parent=0 // pred_check
    _
  $region27: #{gcn_forward.3} parent=0 // pred_check_branch
    %481 = sbr.rel (0) target = $region29
  $region28: #{gcn_forward.3} parent=0 // pred_region
    _
  $region29: #{gcn_forward.3} parent=0 // pred_fallthru
    _

// kernel: gcn_forward.4
$region0: #{gcn_forward.4}
  #allocation0 [shape = 'u32[]', space=smem, size = 0x4, offset = 0x4, fixed_abs, tag = 'smem constant byte address 0x4 - core index']
  #allocation1 [shape = 'u32[144,128]{1,0:T(1,128)}', space=vmem, size = 0x12000, scoped, tag = 'internal scratch']
  #allocation2 [shape = 'f32[128,128]{1,0:T(8,128)}', space=vmem, size = 0x10000, scoped, tag = 'scratch operand']
  %s0 = inlined_call_operand.vmem [shape: bf16[128,128], index: 0, kind: input, shape index: {}]
  %s1 = inlined_call_operand.vmem [shape: bf16[128,128], index: 1, kind: input, shape index: {}]
  %s2 = inlined_call_operand.vmem [shape: bf16[128,128], index: 2, kind: output, shape index: {}]
  %s3 = sld [smem:[#allocation0]]
  $region26: #{gcn_forward.4} parent=0
    _
  %s5 = ssub.s32 1, %s3
  %s6 = scalar_select 0, %s5, %s3
  // Predicated region
  $region2: #{gcn_forward.4} parent=0 // pred_check
    _
  $region3: #{gcn_forward.4} parent=0 // pred_check_branch
    %8 = sbr.rel (0) target = $region5
  $region4: #{gcn_forward.4} parent=0 // pred_region
    _
  $region5: #{gcn_forward.4} parent=0 // pred_fallthru
    _
  // Predicated region
  $region6: #{gcn_forward.4} parent=0 // pred_check
    _
  $region7: #{gcn_forward.4} parent=0 // pred_check_branch
    %10 = sbr.rel (0) target = $region9
  $region8: #{gcn_forward.4} parent=0 // pred_region
    _
  $region9: #{gcn_forward.4} parent=0 // pred_fallthru
    _
  %p12 = scmp.eq.s32.totalorder 0, 0
  // Predicated region
  $region10: #{gcn_forward.4} parent=0 // pred_check
    %p13 = pneg %p12
  $region11: #{gcn_forward.4} parent=0 // pred_check_branch
    %15 = sbr.rel (%p13) target = $region13
  $region12: #{gcn_forward.4} parent=0 // pred_region
    %16 = vst [vmem:[#allocation2] sm:$0xff] 0.0
    %17 = vst [vmem:[#allocation2 + $0x8] sm:$0xff] 0.0
    %18 = vst [vmem:[#allocation2 + $0x10] sm:$0xff] 0.0
    %19 = vst [vmem:[#allocation2 + $0x18] sm:$0xff] 0.0
    %20 = vst [vmem:[#allocation2 + $0x20] sm:$0xff] 0.0
    %21 = vst [vmem:[#allocation2 + $0x28] sm:$0xff] 0.0
    %22 = vst [vmem:[#allocation2 + $0x30] sm:$0xff] 0.0
    %23 = vst [vmem:[#allocation2 + $0x38] sm:$0xff] 0.0
    %24 = vst [vmem:[#allocation2 + $0x40] sm:$0xff] 0.0
    %25 = vst [vmem:[#allocation2 + $0x48] sm:$0xff] 0.0
    %26 = vst [vmem:[#allocation2 + $0x50] sm:$0xff] 0.0
    %27 = vst [vmem:[#allocation2 + $0x58] sm:$0xff] 0.0
    %28 = vst [vmem:[#allocation2 + $0x60] sm:$0xff] 0.0
    %29 = vst [vmem:[#allocation2 + $0x68] sm:$0xff] 0.0
    %30 = vst [vmem:[#allocation2 + $0x70] sm:$0xff] 0.0
    %31 = vst [vmem:[#allocation2 + $0x78] sm:$0xff] 0.0
  $region13: #{gcn_forward.4} parent=0 // pred_fallthru
    _
  %v32 = vld [vmem:[#allocation2] sm:$0xff]
  %v33 = vld [vmem:[#allocation2 + $0x8] sm:$0xff]
  %v34 = vld [vmem:[#allocation2 + $0x10] sm:$0xff]
  %v35 = vld [vmem:[#allocation2 + $0x18] sm:$0xff]
  %v36 = vld [vmem:[#allocation2 + $0x20] sm:$0xff]
  %v37 = vld [vmem:[#allocation2 + $0x28] sm:$0xff]
  %v38 = vld [vmem:[#allocation2 + $0x30] sm:$0xff]
  %v39 = vld [vmem:[#allocation2 + $0x38] sm:$0xff]
  %v40 = vld [vmem:[#allocation2 + $0x40] sm:$0xff]
  %v41 = vld [vmem:[#allocation2 + $0x48] sm:$0xff]
  %v42 = vld [vmem:[#allocation2 + $0x50] sm:$0xff]
  %v43 = vld [vmem:[#allocation2 + $0x58] sm:$0xff]
  %v44 = vld [vmem:[#allocation2 + $0x60] sm:$0xff]
  %v45 = vld [vmem:[#allocation2 + $0x68] sm:$0xff]
  %v46 = vld [vmem:[#allocation2 + $0x70] sm:$0xff]
  %v47 = vld [vmem:[#allocation2 + $0x78] sm:$0xff]
  %v48 = vld [vmem:[%s0] sm:$0xf]
  %v49 = vld [vmem:[%s0 + $0x4] sm:$0xf]
  %v50 = vld [vmem:[%s0 + $0x8] sm:$0xf]
  %v51 = vld [vmem:[%s0 + $0xc] sm:$0xf]
  %v52 = vld [vmem:[%s0 + $0x10] sm:$0xf]
  %v53 = vld [vmem:[%s0 + $0x14] sm:$0xf]
  %v54 = vld [vmem:[%s0 + $0x18] sm:$0xf]
  %v55 = vld [vmem:[%s0 + $0x1c] sm:$0xf]
  %v56 = vld [vmem:[%s0 + $0x20] sm:$0xf]
  %v57 = vld [vmem:[%s0 + $0x24] sm:$0xf]
  %v58 = vld [vmem:[%s0 + $0x28] sm:$0xf]
  %v59 = vld [vmem:[%s0 + $0x2c] sm:$0xf]
  %v60 = vld [vmem:[%s0 + $0x30] sm:$0xf]
  %v61 = vld [vmem:[%s0 + $0x34] sm:$0xf]
  %v62 = vld [vmem:[%s0 + $0x38] sm:$0xf]
  %v63 = vld [vmem:[%s0 + $0x3c] sm:$0xf]
  %v64 = vld [vmem:[%s1] sm:$0xf]
  %v65 = vld [vmem:[%s1 + $0x4] sm:$0xf]
  %v66 = vld [vmem:[%s1 + $0x8] sm:$0xf]
  %v67 = vld [vmem:[%s1 + $0xc] sm:$0xf]
  %v68 = vld [vmem:[%s1 + $0x10] sm:$0xf]
  %v69 = vld [vmem:[%s1 + $0x14] sm:$0xf]
  %v70 = vld [vmem:[%s1 + $0x18] sm:$0xf]
  %v71 = vld [vmem:[%s1 + $0x1c] sm:$0xf]
  %v72 = vld [vmem:[%s1 + $0x20] sm:$0xf]
  %v73 = vld [vmem:[%s1 + $0x24] sm:$0xf]
  %v74 = vld [vmem:[%s1 + $0x28] sm:$0xf]
  %v75 = vld [vmem:[%s1 + $0x2c] sm:$0xf]
  %v76 = vld [vmem:[%s1 + $0x30] sm:$0xf]
  %v77 = vld [vmem:[%s1 + $0x34] sm:$0xf]
  %v78 = vld [vmem:[%s1 + $0x38] sm:$0xf]
  %v79 = vld [vmem:[%s1 + $0x3c] sm:$0xf]
  %v96 = vunpack.c.l.b16 %v48
  %v97 = vunpack.c.l.b16 %v49
  %v98 = vunpack.c.l.b16 %v50
  %v99 = vunpack.c.l.b16 %v51
  %v100 = vunpack.c.l.b16 %v52
  %v101 = vunpack.c.l.b16 %v53
  %v102 = vunpack.c.l.b16 %v54
  %v103 = vunpack.c.l.b16 %v55
  %v104 = vunpack.c.l.b16 %v56
  %v105 = vunpack.c.l.b16 %v57
  %v106 = vunpack.c.l.b16 %v58
  %v107 = vunpack.c.l.b16 %v59
  %v108 = vunpack.c.l.b16 %v60
  %v109 = vunpack.c.l.b16 %v61
  %v110 = vunpack.c.l.b16 %v62
  %v111 = vunpack.c.l.b16 %v63
  %v112 = vpack.c.b16 %v97, %v96
  %v113 = vpack.c.b16 %v99, %v98
  %v114 = vpack.c.b16 %v101, %v100
  %v115 = vpack.c.b16 %v103, %v102
  %v116 = vpack.c.b16 %v105, %v104
  %v117 = vpack.c.b16 %v107, %v106
  %v118 = vpack.c.b16 %v109, %v108
  %v119 = vpack.c.b16 %v111, %v110
  %v144 = vunpack.c.l.b16 %v64
  %v145 = vunpack.c.l.b16 %v65
  %v146 = vunpack.c.l.b16 %v66
  %v147 = vunpack.c.l.b16 %v67
  %v148 = vunpack.c.l.b16 %v68
  %v149 = vunpack.c.l.b16 %v69
  %v150 = vunpack.c.l.b16 %v70
  %v151 = vunpack.c.l.b16 %v71
  %v152 = vunpack.c.l.b16 %v72
  %v153 = vunpack.c.l.b16 %v73
  %v154 = vunpack.c.l.b16 %v74
  %v155 = vunpack.c.l.b16 %v75
  %v156 = vunpack.c.l.b16 %v76
  %v157 = vunpack.c.l.b16 %v77
  %v158 = vunpack.c.l.b16 %v78
  %v159 = vunpack.c.l.b16 %v79
  %v160 = vpack.c.b16 %v145, %v144
  %v161 = vpack.c.b16 %v147, %v146
  %v162 = vpack.c.b16 %v149, %v148
  %v163 = vpack.c.b16 %v151, %v150
  %v164 = vpack.c.b16 %v153, %v152
  %v165 = vpack.c.b16 %v155, %v154
  %v166 = vpack.c.b16 %v157, %v156
  %v167 = vpack.c.b16 %v159, %v158
  %176 = vmatprep.subr.bf16.mxu0 0
  %177 = vmatpush1.bf16.msra.mxu0 %v160
  %178 = vmatprep.subr.bf16.mxu0 0
  %179 = vmatpush1.bf16.msra.mxu0 %v161
  %180 = vmatprep.subr.bf16.mxu0 0
  %181 = vmatpush1.bf16.msra.mxu0 %v162
  %182 = vmatprep.subr.bf16.mxu0 0
  %183 = vmatpush1.bf16.msra.mxu0 %v163
  %184 = vmatprep.subr.bf16.mxu0 0
  %185 = vmatpush1.bf16.msra.mxu0 %v164
  %186 = vmatprep.subr.bf16.mxu0 0
  %187 = vmatpush1.bf16.msra.mxu0 %v165
  %188 = vmatprep.subr.bf16.mxu0 0
  %189 = vmatpush1.bf16.msra.mxu0 %v166
  %190 = vmatprep.subr.bf16.mxu0 0
  %191 = vmatpush1.bf16.msra.mxu0 %v167
  %192 = vmatprep.subr.bf16.mxu0 0
  %193 = vmatpush1.bf16.msra.mxu0 0
  %194 = vmatprep.subr.bf16.mxu0 0
  %195 = vmatpush1.bf16.msra.mxu0 0
  %196 = vmatprep.subr.bf16.mxu0 0
  %197 = vmatpush1.bf16.msra.mxu0 0
  %198 = vmatprep.subr.bf16.mxu0 0
  %199 = vmatpush1.bf16.msra.mxu0 0
  %200 = vmatprep.subr.bf16.mxu0 0
  %201 = vmatpush1.bf16.msra.mxu0 0
  %202 = vmatprep.subr.bf16.mxu0 0
  %203 = vmatpush1.bf16.msra.mxu0 0
  %204 = vmatprep.subr.bf16.mxu0 0
  %205 = vmatpush1.bf16.msra.mxu0 0
  %206 = vmatprep.subr.bf16.mxu0 0
  %207 = vmatpush1.bf16.msra.mxu0 0
  %208 = vmatprep.mubr.bf16.mxu0 0
  %209 = vmatmul.mubr.bf16.gmra.mrb[0].mxu0 %v112
  %v210 = vpop.f32.mrb[0].mxu0
  %v211 = vadd.f32 0.0, %v210
  %v212 = vpop.f32.mrb[0].mxu0
  %v213 = vpop.f32.mrb[0].mxu0
  %v214 = vadd.f32 0.0, %v213
  %v215 = vpop.f32.mrb[0].mxu0
  %216 = vmatprep.mubr.bf16.mxu0 0
  %217 = vmatmul.mubr.bf16.gmra.mrb[0].mxu0 %v113
  %v218 = vpop.f32.mrb[0].mxu0
  %v219 = vadd.f32 0.0, %v218
  %v220 = vpop.f32.mrb[0].mxu0
  %v221 = vpop.f32.mrb[0].mxu0
  %v222 = vadd.f32 0.0, %v221
  %v223 = vpop.f32.mrb[0].mxu0
  %224 = vmatprep.mubr.bf16.mxu0 0
  %225 = vmatmul.mubr.bf16.gmra.mrb[0].mxu0 %v114
  %v226 = vpop.f32.mrb[0].mxu0
  %v227 = vadd.f32 0.0, %v226
  %v228 = vpop.f32.mrb[0].mxu0
  %v229 = vpop.f32.mrb[0].mxu0
  %v230 = vadd.f32 0.0, %v229
  %v231 = vpop.f32.mrb[0].mxu0
  %232 = vmatprep.mubr.bf16.mxu0 0
  %233 = vmatmul.mubr.bf16.gmra.mrb[0].mxu0 %v115
  %v234 = vpop.f32.mrb[0].mxu0
  %v235 = vadd.f32 0.0, %v234
  %v236 = vpop.f32.mrb[0].mxu0
  %v237 = vpop.f32.mrb[0].mxu0
  %v238 = vadd.f32 0.0, %v237
  %v239 = vpop.f32.mrb[0].mxu0
  %240 = vmatprep.mubr.bf16.mxu0 0
  %241 = vmatmul.mubr.bf16.gmra.mrb[0].mxu0 %v116
  %v242 = vpop.f32.mrb[0].mxu0
  %v243 = vadd.f32 0.0, %v242
  %v244 = vpop.f32.mrb[0].mxu0
  %v245 = vpop.f32.mrb[0].mxu0
  %v246 = vadd.f32 0.0, %v245
  %v247 = vpop.f32.mrb[0].mxu0
  %248 = vmatprep.mubr.bf16.mxu0 0
  %249 = vmatmul.mubr.bf16.gmra.mrb[0].mxu0 %v117
  %v250 = vpop.f32.mrb[0].mxu0
  %v251 = vadd.f32 0.0, %v250
  %v252 = vpop.f32.mrb[0].mxu0
  %v253 = vpop.f32.mrb[0].mxu0
  %v254 = vadd.f32 0.0, %v253
  %v255 = vpop.f32.mrb[0].mxu0
  %256 = vmatprep.mubr.bf16.mxu0 0
  %257 = vmatmul.mubr.bf16.gmra.mrb[0].mxu0 %v118
  %v258 = vpop.f32.mrb[0].mxu0
  %v259 = vadd.f32 0.0, %v258
  %v260 = vpop.f32.mrb[0].mxu0
  %v261 = vpop.f32.mrb[0].mxu0
  %v262 = vadd.f32 0.0, %v261
  %v263 = vpop.f32.mrb[0].mxu0
  %264 = vmatprep.mubr.bf16.mxu0 0
  %265 = vmatmul.mubr.bf16.gmra.mrb[0].mxu0 %v119
  %v266 = vpop.f32.mrb[0].mxu0
  %v267 = vadd.f32 0.0, %v266
  %v268 = vpop.f32.mrb[0].mxu0
  %v269 = vpop.f32.mrb[0].mxu0
  %v270 = vadd.f32 0.0, %v269
  %v271 = vpop.f32.mrb[0].mxu0
  %272 = vdwg.mxu0
  %v273 = vadd.f32 %v32, %v211
  %v274 = vadd.f32 %v33, %v214
  %v275 = vadd.f32 %v34, %v219
  %v276 = vadd.f32 %v35, %v222
  %v277 = vadd.f32 %v36, %v227
  %v278 = vadd.f32 %v37, %v230
  %v279 = vadd.f32 %v38, %v235
  %v280 = vadd.f32 %v39, %v238
  %v281 = vadd.f32 %v40, %v243
  %v282 = vadd.f32 %v41, %v246
  %v283 = vadd.f32 %v42, %v251
  %v284 = vadd.f32 %v43, %v254
  %v285 = vadd.f32 %v44, %v259
  %v286 = vadd.f32 %v45, %v262
  %v287 = vadd.f32 %v46, %v267
  %v288 = vadd.f32 %v47, %v270
  %289 = vst [vmem:[#allocation2] sm:$0xff] %v273
  %290 = vst [vmem:[#allocation2 + $0x8] sm:$0xff] %v274
  %291 = vst [vmem:[#allocation2 + $0x10] sm:$0xff] %v275
  %292 = vst [vmem:[#allocation2 + $0x18] sm:$0xff] %v276
  %293 = vst [vmem:[#allocation2 + $0x20] sm:$0xff] %v277
  %294 = vst [vmem:[#allocation2 + $0x28] sm:$0xff] %v278
  %295 = vst [vmem:[#allocation2 + $0x30] sm:$0xff] %v279
  %296 = vst [vmem:[#allocation2 + $0x38] sm:$0xff] %v280
  %297 = vst [vmem:[#allocation2 + $0x40] sm:$0xff] %v281
  %298 = vst [vmem:[#allocation2 + $0x48] sm:$0xff] %v282
  %299 = vst [vmem:[#allocation2 + $0x50] sm:$0xff] %v283
  %300 = vst [vmem:[#allocation2 + $0x58] sm:$0xff] %v284
  %301 = vst [vmem:[#allocation2 + $0x60] sm:$0xff] %v285
  %302 = vst [vmem:[#allocation2 + $0x68] sm:$0xff] %v286
  %303 = vst [vmem:[#allocation2 + $0x70] sm:$0xff] %v287
  %304 = vst [vmem:[#allocation2 + $0x78] sm:$0xff] %v288
  // Predicated region
  $region14: #{gcn_forward.4} parent=0 // pred_check
    %p305 = pneg %p12
  $region15: #{gcn_forward.4} parent=0 // pred_check_branch
    %307 = sbr.rel (%p305) target = $region17
  $region16: #{gcn_forward.4} parent=0 // pred_region
    %v308 = vld [vmem:[#allocation2] sm:$0xff]
    %v309 = vld [vmem:[#allocation2 + $0x8] sm:$0xff]
    %v310 = vld [vmem:[#allocation2 + $0x10] sm:$0xff]
    %v311 = vld [vmem:[#allocation2 + $0x18] sm:$0xff]
    %v312 = vld [vmem:[#allocation2 + $0x20] sm:$0xff]
    %v313 = vld [vmem:[#allocation2 + $0x28] sm:$0xff]
    %v314 = vld [vmem:[#allocation2 + $0x30] sm:$0xff]
    %v315 = vld [vmem:[#allocation2 + $0x38] sm:$0xff]
    %v316 = vld [vmem:[#allocation2 + $0x40] sm:$0xff]
    %v317 = vld [vmem:[#allocation2 + $0x48] sm:$0xff]
    %v318 = vld [vmem:[#allocation2 + $0x50] sm:$0xff]
    %v319 = vld [vmem:[#allocation2 + $0x58] sm:$0xff]
    %v320 = vld [vmem:[#allocation2 + $0x60] sm:$0xff]
    %v321 = vld [vmem:[#allocation2 + $0x68] sm:$0xff]
    %v322 = vld [vmem:[#allocation2 + $0x70] sm:$0xff]
    %v323 = vld [vmem:[#allocation2 + $0x78] sm:$0xff]
    %v324 = vpack.c.bf16 %v309, %v308
    %v325 = vpack.c.bf16 %v311, %v310
    %v326 = vpack.c.bf16 %v313, %v312
    %v327 = vpack.c.bf16 %v315, %v314
    %v328 = vpack.c.bf16 %v317, %v316
    %v329 = vpack.c.bf16 %v319, %v318
    %v330 = vpack.c.bf16 %v321, %v320
    %v331 = vpack.c.bf16 %v323, %v322
    %v340 = vunpack.c.l.b16 %v324
    %v341 = vunpack.c.h.b16 %v324
    %v342 = vunpack.c.l.b16 %v325
    %v343 = vunpack.c.h.b16 %v325
    %v344 = vunpack.c.l.b16 %v326
    %v345 = vunpack.c.h.b16 %v326
    %v346 = vunpack.c.l.b16 %v327
    %v347 = vunpack.c.h.b16 %v327
    %v348 = vunpack.c.l.b16 %v328
    %v349 = vunpack.c.h.b16 %v328
    %v350 = vunpack.c.l.b16 %v329
    %v351 = vunpack.c.h.b16 %v329
    %v352 = vunpack.c.l.b16 %v330
    %v353 = vunpack.c.h.b16 %v330
    %v354 = vunpack.c.l.b16 %v331
    %v355 = vunpack.c.h.b16 %v331
    %v356 = vpack.c.b16 %v340, %v340
    %v357 = vpack.c.b16 %v341, %v341
    %v358 = vpack.c.b16 %v342, %v342
    %v359 = vpack.c.b16 %v343, %v343
    %v360 = vpack.c.b16 %v344, %v344
    %v361 = vpack.c.b16 %v345, %v345
    %v362 = vpack.c.b16 %v346, %v346
    %v363 = vpack.c.b16 %v347, %v347
    %v364 = vpack.c.b16 %v348, %v348
    %v365 = vpack.c.b16 %v349, %v349
    %v366 = vpack.c.b16 %v350, %v350
    %v367 = vpack.c.b16 %v351, %v351
    %v368 = vpack.c.b16 %v352, %v352
    %v369 = vpack.c.b16 %v353, %v353
    %v370 = vpack.c.b16 %v354, %v354
    %v371 = vpack.c.b16 %v355, %v355
    %388 = vst [vmem:[%s2] sm:$0xf] %v356
    %389 = vst [vmem:[%s2 + $0x4] sm:$0xf] %v357
    %390 = vst [vmem:[%s2 + $0x8] sm:$0xf] %v358
    %391 = vst [vmem:[%s2 + $0xc] sm:$0xf] %v359
    %392 = vst [vmem:[%s2 + $0x10] sm:$0xf] %v360
    %393 = vst [vmem:[%s2 + $0x14] sm:$0xf] %v361
    %394 = vst [vmem:[%s2 + $0x18] sm:$0xf] %v362
    %395 = vst [vmem:[%s2 + $0x1c] sm:$0xf] %v363
    %396 = vst [vmem:[%s2 + $0x20] sm:$0xf] %v364
    %397 = vst [vmem:[%s2 + $0x24] sm:$0xf] %v365
    %398 = vst [vmem:[%s2 + $0x28] sm:$0xf] %v366
    %399 = vst [vmem:[%s2 + $0x2c] sm:$0xf] %v367
    %400 = vst [vmem:[%s2 + $0x30] sm:$0xf] %v368
    %401 = vst [vmem:[%s2 + $0x34] sm:$0xf] %v369
    %402 = vst [vmem:[%s2 + $0x38] sm:$0xf] %v370
    %403 = vst [vmem:[%s2 + $0x3c] sm:$0xf] %v371
  $region17: #{gcn_forward.4} parent=0 // pred_fallthru
    _
  // Predicated region
  $region18: #{gcn_forward.4} parent=0 // pred_check
    _
  $region19: #{gcn_forward.4} parent=0 // pred_check_branch
    %405 = sbr.rel (0) target = $region21
  $region20: #{gcn_forward.4} parent=0 // pred_region
    _
  $region21: #{gcn_forward.4} parent=0 // pred_fallthru
    _
  // Predicated region
  $region22: #{gcn_forward.4} parent=0 // pred_check
    _
  $region23: #{gcn_forward.4} parent=0 // pred_check_branch
    %407 = sbr.rel (0) target = $region25
  $region24: #{gcn_forward.4} parent=0 // pred_region
    _
  $region25: #{gcn_forward.4} parent=0 // pred_fallthru
    _

</llo_original>
